<compile_context>
chip_gen: v5e
topology: v5e:2x2
jax: 0.10.0
libtpu: 0.0.40
codegen_flags: <defaults>
</compile_context>

<pallas_src>
import functools

import jax
import jax.numpy as jnp
from jax.experimental import pallas as pl
from jax.experimental.pallas import tpu as pltpu


def _round_up(x, m):
    return (x + m - 1) // m * m


def _lm_head_kernel(x_ref, w1_ref, b1_ref, g_ref, bt_ref, w2_ref, b2_ref,
                    o_ref, h_ref):
    """grid = (batch_tiles, vocab_tiles); h_ref: [tb, D] scratch (matmul dtype)."""
    j = pl.program_id(1)

    # dense -> activation -> layer_norm, computed once per batch tile.
    @pl.when(j == 0)
    def _():
        h = jnp.dot(x_ref[...], w1_ref[...],
                    preferred_element_type=jnp.float32)
        h = h + b1_ref[...].astype(jnp.float32)
        # TODO(synk): fairseq "gelu" is the exact erf-based GELU; tanh-approx
        # GELU used here (guaranteed Mosaic lowering, ~1e-3 rel. difference).
        h = jax.nn.gelu(h, approximate=True)
        # LayerNorm over the feature dim (biased variance, eps=1e-5).
        mu = jnp.mean(h, axis=-1, keepdims=True)
        var = jnp.mean(jnp.square(h - mu), axis=-1, keepdims=True)
        h = (h - mu) * jax.lax.rsqrt(var + 1e-5)
        h = h * g_ref[...].astype(jnp.float32) + bt_ref[...].astype(jnp.float32)
        h_ref[...] = h.astype(h_ref.dtype)

    # vocab projection tile: [tb, D] @ [D, tn] + b2[tn]
    out = jnp.dot(h_ref[...], w2_ref[...], preferred_element_type=jnp.float32)
    o_ref[...] = (out + b2_ref[...].astype(jnp.float32)).astype(o_ref.dtype)


@functools.partial(jax.jit,
                   static_argnames=("block_b", "block_n", "matmul_dtype"))
def irbert_lm_head(features, w1_t, b1, ln_gamma, ln_beta, w2_t, b2, *,
                   block_b=256, block_n=1024, matmul_dtype=None):
    """IRBertLMHead forward.

    features: [B, D]   (masked_tokens row-select, if any, done by the caller)
    w1_t:     [D, D]   dense weight, pre-transposed to [in, out]
    b1:       [D]
    ln_gamma, ln_beta: [D]
    w2_t:     [D, V]   output projection weight, pre-transposed to [in, out]
    b2:       [V]
    returns:  [B, V]
    """
    # TODO(synk): masked_tokens boolean gather (dynamic shape) is not done in
    # the kernel; callers select rows before calling.
    B, D = features.shape
    V = w2_t.shape[1]
    out_dtype = features.dtype

    if matmul_dtype is not None:
        features = features.astype(matmul_dtype)
        w1_t = w1_t.astype(matmul_dtype)
        w2_t = w2_t.astype(matmul_dtype)

    # ---- batch tile: balanced split across tiles, multiple of 8 sublanes ----
    n_bt = max(1, -(-B // block_b))                 # ceil(B / block_b)
    tb = min(_round_up(-(-B // n_bt), 8), _round_up(B, 8))
    B_pad = _round_up(B, tb)

    # ---- vocab tile: multiple of 128 lanes, clamped to the VMEM budget ------
    vmem_budget = 48 * 1024 * 1024
    it_w = jnp.dtype(w2_t.dtype).itemsize
    it_x = jnp.dtype(features.dtype).itemsize
    it_o = jnp.dtype(out_dtype).itemsize
    tn = min(block_n, _round_up(V, 128))

    def _vmem_usage(tn_):
        # double-buffered inputs/outputs + persistent f32-or-bf16 scratch
        return (2 * (tb * D * it_x + D * D * it_w + D * tn_ * it_w
                     + tb * tn_ * it_o + (3 * D) * it_x + tn_ * it_w)
                + tb * D * it_w)

    while tn > 128 and _vmem_usage(tn) > int(0.9 * vmem_budget):
        tn -= 128
    # TODO(synk): very large D (D*D weight alone > VMEM budget) would need a
    # K-tiled dense matmul; not implemented (BERT-sized embed dims assumed).

    V_pad = _round_up(V, tn)

    x = features if B_pad == B else jnp.pad(features, ((0, B_pad - B), (0, 0)))
    w2p = w2_t if V_pad == V else jnp.pad(w2_t, ((0, 0), (0, V_pad - V)))
    b2p = b2 if V_pad == V else jnp.pad(b2, (0, V_pad - V))

    b1_2d = b1.reshape(1, D)
    g_2d = ln_gamma.reshape(1, D)
    bt_2d = ln_beta.reshape(1, D)
    b2_2d = b2p.reshape(1, V_pad)

    grid = (B_pad // tb, V_pad // tn)

    cost = pl.CostEstimate(
        flops=int(2 * B_pad * D * D + 2 * B_pad * D * V_pad),
        transcendentals=int(B_pad * D),
        bytes_accessed=int((x.size + w1_t.size) * it_x + w2p.size * it_w
                           + B_pad * V_pad * it_o),
    )

    out = pl.pallas_call(
        _lm_head_kernel,
        out_shape=jax.ShapeDtypeStruct((B_pad, V_pad), out_dtype),
        grid_spec=pltpu.PrefetchScalarGridSpec(
            num_scalar_prefetch=0,
            grid=grid,
            in_specs=[
                pl.BlockSpec((tb, D), lambda i, j: (i, 0)),     # x (batch tile)
                pl.BlockSpec((D, D), lambda i, j: (0, 0)),      # dense weight
                pl.BlockSpec((1, D), lambda i, j: (0, 0)),      # dense bias
                pl.BlockSpec((1, D), lambda i, j: (0, 0)),      # LN gamma
                pl.BlockSpec((1, D), lambda i, j: (0, 0)),      # LN beta
                pl.BlockSpec((D, tn), lambda i, j: (0, j)),     # proj weight tile
                pl.BlockSpec((1, tn), lambda i, j: (0, j)),     # proj bias tile
            ],
            out_specs=pl.BlockSpec((tb, tn), lambda i, j: (i, j)),
            scratch_shapes=[pltpu.VMEM((tb, D), w2p.dtype)],
        ),
        compiler_params=pltpu.CompilerParams(
            dimension_semantics=("parallel", "arbitrary"),
            vmem_limit_bytes=vmem_budget,
        ),
        cost_estimate=cost,
    )(x, w1_t, b1_2d, g_2d, bt_2d, w2p, b2_2d)

    return out[:B, :V]


if __name__ == "__main__":
    # Small shapes consistent with the module (masked positions x embed_dim).
    B = 8            # number of (already-gathered) masked-token positions
    embed_dim = 32
    output_dim = 80  # toy "vocab"; deliberately not a multiple of 128

    key = jax.random.PRNGKey(0)
    kx, kw1, kb1, kg, kbeta, kw2 = jax.random.split(key, 6)

    features = jax.random.normal(kx, (B, embed_dim), dtype=jnp.float32)

    # PyTorch Linear layout: weight is [out, in].
    w1 = jax.random.normal(kw1, (embed_dim, embed_dim), jnp.float32) * 0.05
    b1 = jax.random.normal(kb1, (embed_dim,), jnp.float32) * 0.05
    ln_gamma = 1.0 + 0.1 * jax.random.normal(kg, (embed_dim,), jnp.float32)
    ln_beta = 0.1 * jax.random.normal(kbeta, (embed_dim,), jnp.float32)
    w2 = jax.random.normal(kw2, (output_dim, embed_dim), jnp.float32) * 0.05
    b2 = jnp.zeros((output_dim,), jnp.float32)   # module inits bias to zeros

    out = irbert_lm_head(features, w1.T, b1, ln_gamma, ln_beta, w2.T, b2)
    out = jax.block_until_ready(out)

    # Reference in plain JAX (same tanh-approx GELU, LayerNorm eps=1e-5).
    h = features @ w1.T + b1
    h = jax.nn.gelu(h, approximate=True)
    mu = h.mean(-1, keepdims=True)
    var = ((h - mu) ** 2).mean(-1, keepdims=True)
    h = (h - mu) / jnp.sqrt(var + 1e-5) * ln_gamma + ln_beta
    ref = h @ w2.T + b2

    assert out.shape == (B, output_dim)
    assert jnp.allclose(out, ref, atol=1e-4, rtol=1e-4), (
        float(jnp.max(jnp.abs(out - ref))))

    print("KERNEL_OK")
</pallas_src>

<mosaic_0001>
module attributes {stable_mosaic.version = 11 : i64} {
  func.func @_lm_head_kernel(%arg0: i32, %arg1: i32, %arg2: memref<8x32xf32, #tpu.memory_space<vmem>>, %arg3: memref<32x32xf32, #tpu.memory_space<vmem>>, %arg4: memref<1x32xf32, #tpu.memory_space<vmem>>, %arg5: memref<1x32xf32, #tpu.memory_space<vmem>>, %arg6: memref<1x32xf32, #tpu.memory_space<vmem>>, %arg7: memref<32x128xf32, #tpu.memory_space<vmem>>, %arg8: memref<1x128xf32, #tpu.memory_space<vmem>>, %arg9: memref<8x128xf32, #tpu.memory_space<vmem>>, %arg10: memref<8x32xf32, #tpu.memory_space<vmem>>) attributes {dimension_semantics = [#tpu.dimension_semantics<parallel>, #tpu.dimension_semantics<arbitrary>], iteration_bounds = array<i64: 1, 1>, scalar_prefetch = 0 : i64, scratch_operands = 1 : i64, tpu.core_type = #tpu.core_type<tc>, window_params = [{transform_indices = @transform_0, window_bounds = array<i64: 8, 32>}, {pipeline_mode = #tpu.pipeline_mode<synchronous>, transform_indices = @transform_1, window_bounds = array<i64: 32, 32>}, {pipeline_mode = #tpu.pipeline_mode<synchronous>, transform_indices = @transform_2, window_bounds = array<i64: 1, 32>}, {pipeline_mode = #tpu.pipeline_mode<synchronous>, transform_indices = @transform_3, window_bounds = array<i64: 1, 32>}, {pipeline_mode = #tpu.pipeline_mode<synchronous>, transform_indices = @transform_4, window_bounds = array<i64: 1, 32>}, {transform_indices = @transform_5, window_bounds = array<i64: 32, 128>}, {transform_indices = @transform_6, window_bounds = array<i64: 1, 128>}, {transform_indices = @transform_7, window_bounds = array<i64: 8, 128>}]} {
    %c0_i32 = arith.constant 0 : i32
    %0 = arith.cmpi eq, %arg1, %c0_i32 : i32
    %1 = arith.extui %0 : i1 to i32
    %c0_i32_0 = arith.constant 0 : i32
    %2 = arith.cmpi ne, %1, %c0_i32_0 : i32
    scf.if %2 {
      %c0_8 = arith.constant 0 : index
      %c0_9 = arith.constant 0 : index
      %10 = vector.load %arg2[%c0_8, %c0_9] : memref<8x32xf32, #tpu.memory_space<vmem>>, vector<8x32xf32>
      %c0_10 = arith.constant 0 : index
      %c0_11 = arith.constant 0 : index
      %11 = vector.load %arg3[%c0_10, %c0_11] : memref<32x32xf32, #tpu.memory_space<vmem>>, vector<32x32xf32>
      %cst_12 = arith.constant dense<0.000000e+00> : vector<8x32xf32>
      %12 = tpu.matmul %10, %11, %cst_12 {dimension_numbers = #tpu.dot_dimension_numbers<[1], [0], [0], [1], [0, 0, 1, 1], [], []>} : vector<8x32xf32>, vector<32x32xf32>, vector<8x32xf32> -> vector<8x32xf32>
      %c0_13 = arith.constant 0 : index
      %c0_14 = arith.constant 0 : index
      %13 = vector.load %arg4[%c0_13, %c0_14] : memref<1x32xf32, #tpu.memory_space<vmem>>, vector<1x32xf32>
      %14 = vector.broadcast %13 : vector<1x32xf32> to vector<8x32xf32>
      %15 = arith.addf %12, %14 : vector<8x32xf32>
      %16 = arith.mulf %15, %15 : vector<8x32xf32>
      %17 = arith.mulf %15, %16 : vector<8x32xf32>
      %cst_15 = arith.constant 4.471500e-02 : f32
      %18 = vector.broadcast %cst_15 : f32 to vector<8x32xf32>
      %19 = arith.mulf %18, %17 : vector<8x32xf32>
      %20 = arith.addf %15, %19 : vector<8x32xf32>
      %cst_16 = arith.constant 0.797884583 : f32
      %21 = vector.broadcast %cst_16 : f32 to vector<8x32xf32>
      %22 = arith.mulf %21, %20 : vector<8x32xf32>
      %23 = math.tanh %22 : vector<8x32xf32>
      %cst_17 = arith.constant 1.000000e+00 : f32
      %24 = vector.broadcast %cst_17 : f32 to vector<8x32xf32>
      %25 = arith.addf %24, %23 : vector<8x32xf32>
      %cst_18 = arith.constant 5.000000e-01 : f32
      %26 = vector.broadcast %cst_18 : f32 to vector<8x32xf32>
      %27 = arith.mulf %26, %25 : vector<8x32xf32>
      %28 = arith.mulf %15, %27 : vector<8x32xf32>
      %cst_19 = arith.constant dense<0.000000e+00> : vector<8xf32>
      %29 = vector.multi_reduction <add>, %28, %cst_19 [1] : vector<8x32xf32> to vector<8xf32>
      %30 = vector.shape_cast %29 : vector<8xf32> to vector<8x1xf32>
      %cst_20 = arith.constant 3.200000e+01 : f32
      %31 = vector.broadcast %cst_20 : f32 to vector<8x1xf32>
      %32 = arith.divf %30, %31 : vector<8x1xf32>
      %33 = vector.broadcast %32 : vector<8x1xf32> to vector<8x32xf32>
      %34 = arith.subf %28, %33 : vector<8x32xf32>
      %35 = arith.mulf %34, %34 : vector<8x32xf32>
      %cst_21 = arith.constant dense<0.000000e+00> : vector<8xf32>
      %36 = vector.multi_reduction <add>, %35, %cst_21 [1] : vector<8x32xf32> to vector<8xf32>
      %37 = vector.shape_cast %36 : vector<8xf32> to vector<8x1xf32>
      %cst_22 = arith.constant 3.200000e+01 : f32
      %38 = vector.broadcast %cst_22 : f32 to vector<8x1xf32>
      %39 = arith.divf %37, %38 : vector<8x1xf32>
      %40 = vector.broadcast %32 : vector<8x1xf32> to vector<8x32xf32>
      %41 = arith.subf %28, %40 : vector<8x32xf32>
      %cst_23 = arith.constant 9.99999974E-6 : f32
      %42 = vector.broadcast %cst_23 : f32 to vector<8x1xf32>
      %43 = arith.addf %39, %42 : vector<8x1xf32>
      %44 = math.rsqrt %43 : vector<8x1xf32>
      %45 = vector.broadcast %44 : vector<8x1xf32> to vector<8x32xf32>
      %46 = arith.mulf %41, %45 : vector<8x32xf32>
      %c0_24 = arith.constant 0 : index
      %c0_25 = arith.constant 0 : index
      %47 = vector.load %arg5[%c0_24, %c0_25] : memref<1x32xf32, #tpu.memory_space<vmem>>, vector<1x32xf32>
      %48 = vector.broadcast %47 : vector<1x32xf32> to vector<8x32xf32>
      %49 = arith.mulf %46, %48 : vector<8x32xf32>
      %c0_26 = arith.constant 0 : index
      %c0_27 = arith.constant 0 : index
      %50 = vector.load %arg6[%c0_26, %c0_27] : memref<1x32xf32, #tpu.memory_space<vmem>>, vector<1x32xf32>
      %51 = vector.broadcast %50 : vector<1x32xf32> to vector<8x32xf32>
      %52 = arith.addf %49, %51 : vector<8x32xf32>
      %c0_28 = arith.constant 0 : index
      %c0_29 = arith.constant 0 : index
      %53 = vector.load %arg10[%c0_28, %c0_29] : memref<8x32xf32, #tpu.memory_space<vmem>>, vector<8x32xf32>
      tpu.vector_store %arg10[%c0_28, %c0_29], %52 {strides = array<i32>} : memref<8x32xf32, #tpu.memory_space<vmem>>, vector<8x32xf32>,
    } else {
    }
    %c0 = arith.constant 0 : index
    %c0_1 = arith.constant 0 : index
    %3 = vector.load %arg10[%c0, %c0_1] : memref<8x32xf32, #tpu.memory_space<vmem>>, vector<8x32xf32>
    %c0_2 = arith.constant 0 : index
    %c0_3 = arith.constant 0 : index
    %4 = vector.load %arg7[%c0_2, %c0_3] : memref<32x128xf32, #tpu.memory_space<vmem>>, vector<32x128xf32>
    %cst = arith.constant dense<0.000000e+00> : vector<8x128xf32>
    %5 = tpu.matmul %3, %4, %cst {dimension_numbers = #tpu.dot_dimension_numbers<[1], [0], [0], [1], [0, 0, 1, 1], [], []>} : vector<8x32xf32>, vector<32x128xf32>, vector<8x128xf32> -> vector<8x128xf32>
    %c0_4 = arith.constant 0 : index
    %c0_5 = arith.constant 0 : index
    %6 = vector.load %arg8[%c0_4, %c0_5] : memref<1x128xf32, #tpu.memory_space<vmem>>, vector<1x128xf32>
    %7 = vector.broadcast %6 : vector<1x128xf32> to vector<8x128xf32>
    %8 = arith.addf %5, %7 : vector<8x128xf32>
    %c0_6 = arith.constant 0 : index
    %c0_7 = arith.constant 0 : index
    %9 = vector.load %arg9[%c0_6, %c0_7] : memref<8x128xf32, #tpu.memory_space<vmem>>, vector<8x128xf32>
    tpu.vector_store %arg9[%c0_6, %c0_7], %8 {strides = array<i32>} : memref<8x128xf32, #tpu.memory_space<vmem>>, vector<8x128xf32>,
    return
  }
  func.func @transform_0(%arg0: i32, %arg1: i32) -> (i32, i32) {
    %c0_i32 = arith.constant 0 : i32
    %c0_i32_0 = arith.constant 0 : i32
    return %arg0, %c0_i32 : i32, i32
  }
  func.func @transform_1(%arg0: i32, %arg1: i32) -> (i32, i32) {
    %c0_i32 = arith.constant 0 : i32
    %c0_i32_0 = arith.constant 0 : i32
    %c0_i32_1 = arith.constant 0 : i32
    return %c0_i32, %c0_i32_0 : i32, i32
  }
  func.func @transform_2(%arg0: i32, %arg1: i32) -> (i32, i32) {
    %c0_i32 = arith.constant 0 : i32
    %c0_i32_0 = arith.constant 0 : i32
    %c0_i32_1 = arith.constant 0 : i32
    return %c0_i32, %c0_i32_0 : i32, i32
  }
  func.func @transform_3(%arg0: i32, %arg1: i32) -> (i32, i32) {
    %c0_i32 = arith.constant 0 : i32
    %c0_i32_0 = arith.constant 0 : i32
    %c0_i32_1 = arith.constant 0 : i32
    return %c0_i32, %c0_i32_0 : i32, i32
  }
  func.func @transform_4(%arg0: i32, %arg1: i32) -> (i32, i32) {
    %c0_i32 = arith.constant 0 : i32
    %c0_i32_0 = arith.constant 0 : i32
    %c0_i32_1 = arith.constant 0 : i32
    return %c0_i32, %c0_i32_0 : i32, i32
  }
  func.func @transform_5(%arg0: i32, %arg1: i32) -> (i32, i32) {
    %c0_i32 = arith.constant 0 : i32
    %c0_i32_0 = arith.constant 0 : i32
    return %c0_i32, %arg1 : i32, i32
  }
  func.func @transform_6(%arg0: i32, %arg1: i32) -> (i32, i32) {
    %c0_i32 = arith.constant 0 : i32
    %c0_i32_0 = arith.constant 0 : i32
    return %c0_i32, %arg1 : i32, i32
  }
  func.func @transform_7(%arg0: i32, %arg1: i32) -> (i32, i32) {
    %c0_i32 = arith.constant 0 : i32
    return %arg0, %arg1 : i32, i32
  }
}

</mosaic_0001>

<llo_original>
// kernel: irbert_lm_head.1
$region0: #{irbert_lm_head.1}
  #allocation0 [shape = 'u32[]', space=smem, size = 0x4, offset = 0x4, fixed_abs, tag = 'smem constant byte address 0x4 - core index']
  #allocation1 [shape = 'u32[72,128]{1,0:T(1,128)}', space=vmem, size = 0x9000, scoped, tag = 'internal scratch']
  #allocation2 [shape = 'f32[8,32]{1,0:T(8,128)}', space=vmem, size = 0x1000, scoped, tag = 'scratch operand']
  %s0 = inlined_call_operand.vmem [shape: f32[8,32], index: 0, kind: input, shape index: {}]
  %s1 = inlined_call_operand.vmem [shape: f32[32,32], index: 1, kind: input, shape index: {}]
  %s2 = inlined_call_operand.vmem [shape: f32[1,32], index: 2, kind: input, shape index: {}]
  %s3 = inlined_call_operand.vmem [shape: f32[1,32], index: 3, kind: input, shape index: {}]
  %s4 = inlined_call_operand.vmem [shape: f32[1,32], index: 4, kind: input, shape index: {}]
  %s5 = inlined_call_operand.vmem [shape: f32[32,128], index: 5, kind: input, shape index: {}]
  %s6 = inlined_call_operand.vmem [shape: f32[1,128], index: 6, kind: input, shape index: {}]
  %s7 = inlined_call_operand.hbm [shape: f32[8,128], index: 7, kind: output, shape index: {}]
  %s8 = sld [smem:[#allocation0]]
  $region42: #{irbert_lm_head.1} parent=0
    _
  %s10 = ssub.s32 1, %s8
  %s11 = scalar_select 0, %s10, %s8
  $region1: #{irbert_lm_head.1} parent=0
    #allocation3 [shape = 'u8[4096]{0}', space=vmem, size = 0x1000, scoped, tag = 'output window, operand 0, single buffered']
    #allocation4 [shape = 's32[1]{0}', space=sflag, size = 0x4, scoped, tag = 'scoped memory for irbert_lm_head.1']
    %12 = vsyncpa [#allocation4], 0
    // Predicated region
    $region2: #{irbert_lm_head.1} parent=1 // pred_check
      _
    $region3: #{irbert_lm_head.1} parent=1 // pred_check_branch
      %14 = sbr.rel (0) target = $region5
    $region4: #{irbert_lm_head.1} parent=1 // pred_region
      _
    $region5: #{irbert_lm_head.1} parent=1 // pred_fallthru
      _
    // Predicated region
    $region6: #{irbert_lm_head.1} parent=1 // pred_check
      _
    $region7: #{irbert_lm_head.1} parent=1 // pred_check_branch
      %16 = sbr.rel (0) target = $region9
    $region8: #{irbert_lm_head.1} parent=1 // pred_region
      _
    $region9: #{irbert_lm_head.1} parent=1 // pred_fallthru
      _
    // Predicated region
    $region10: #{irbert_lm_head.1} parent=1 // pred_check
      _
    $region11: #{irbert_lm_head.1} parent=1 // pred_check_branch
      %18 = sbr.rel (0) target = $region13
    $region12: #{irbert_lm_head.1} parent=1 // pred_region
      _
    $region13: #{irbert_lm_head.1} parent=1 // pred_fallthru
      _
    // Predicated region
    $region14: #{irbert_lm_head.1} parent=1 // pred_check
      _
    $region15: #{irbert_lm_head.1} parent=1 // pred_check_branch
      %20 = sbr.rel (0) target = $region17
    $region16: #{irbert_lm_head.1} parent=1 // pred_region
      _
    $region17: #{irbert_lm_head.1} parent=1 // pred_fallthru
      _
    // Predicated region
    $region18: #{irbert_lm_head.1} parent=1 // pred_check
      _
    $region19: #{irbert_lm_head.1} parent=1 // pred_check_branch
      %22 = sbr.rel (0) target = $region21
    $region20: #{irbert_lm_head.1} parent=1 // pred_region
      _
    $region21: #{irbert_lm_head.1} parent=1 // pred_fallthru
      _
    // Predicated region
    $region22: #{irbert_lm_head.1} parent=1 // pred_check
      _
    $region23: #{irbert_lm_head.1} parent=1 // pred_check_branch
      %24 = sbr.rel (0) target = $region25
    $region24: #{irbert_lm_head.1} parent=1 // pred_region
      _
    $region25: #{irbert_lm_head.1} parent=1 // pred_fallthru
      _
    // Predicated region
    $region26: #{irbert_lm_head.1} parent=1 // pred_check
      _
    $region27: #{irbert_lm_head.1} parent=1 // pred_check_branch
      %26 = sbr.rel (0) target = $region29
    $region28: #{irbert_lm_head.1} parent=1 // pred_region
      _
    $region29: #{irbert_lm_head.1} parent=1 // pred_fallthru
      _
    %p27 = scmp.eq.s32.totalorder 0, 0
    // Predicated region
    $region30: #{irbert_lm_head.1} parent=1 // pred_check
      %p28 = pneg %p27
    $region31: #{irbert_lm_head.1} parent=1 // pred_check_branch
      %30 = sbr.rel (%p28) target = $region33
    $region32: #{irbert_lm_head.1} parent=1 // pred_region
      %v31 = vld [vmem:[%s0] sm:$0xff]
      %v32 = vld [vmem:[%s1] sm:$0xff]
      %v33 = vld [vmem:[%s1 + $0x8] sm:$0xff]
      %v34 = vld [vmem:[%s1 + $0x10] sm:$0xff]
      %v35 = vld [vmem:[%s1 + $0x18] sm:$0xff]
      %v36 = vld [vmem:[%s2] sm:$0x1]
      %v38 = vperm.slane %v36, 0
      %vm40 = vcmask 261120
      %v42 = vsel %vm40, %v31, 0
      %44 = vmatpush.msra.mxu0 0.0
      %45 = vmatpush.msra.mxu0 0.0
      %46 = vmatpush.msra.mxu0 0.0
      %47 = vmatpush.msra.mxu0 0.0
      %48 = vmatpush.msra.mxu0 0.0
      %49 = vmatpush.msra.mxu0 0.0
      %50 = vmatpush.msra.mxu0 0.0
      %51 = vmatpush.msra.mxu0 0.0
      %52 = vmatpush.msra.mxu0 0.0
      %53 = vmatpush.msra.mxu0 0.0
      %54 = vmatpush.msra.mxu0 0.0
      %55 = vmatpush.msra.mxu0 0.0
      %56 = vmatpush.msra.mxu0 %v35
      %57 = vmatpush.msra.mxu0 %v34
      %58 = vmatpush.msra.mxu0 %v33
      %59 = vmatpush.msra.mxu0 %v32
      %60 = vmatmul.f32.gmra.mxu0 %v42
      %v61 = vpop.f32.mrf.mxu0
      %v62 = vadd.f32 %v38, %v61
      %63 = vdwg.mxu0
      %v64 = vmul.f32 %v62, %v62
      %v65 = vmul.f32 %v62, %v64
      %v66 = vmul.f32 %v65, 0.044715
      %v67 = vadd.f32 %v62, %v66
      %v68 = vmul.f32 %v67, 0.7978846
      %v69 = vtanh.pop %v68
      %v70 = vadd.f32 %v69, 1.0
      %v71 = vmul.f32 %v70, 0.5
      %v72 = vmul.f32 %v62, %v71
      %v73 = vsel %vm40, %v72, 0.0
      %74 = vadd.xlane.f32.xlu0 %v73
      %v75 = vpop.xlane.xlu0 %74
      %v76 = vrcp.pop 32.0
      %v77 = vmul.f32 32.0, %v76
      %v78 = vsub.f32 1.0, %v77
      %v79 = vmul.f32 %v76, %v78
      %v80 = vadd.f32 %v76, %v79
      %vm81 = vweird.f32 %v76
      %v82 = vsel %vm81, %v76, %v80
      %v83 = vmul.f32 %v75, %v82
      %v84 = vsub.f32 %v72, %v83
      %v85 = vmul.f32 %v84, %v84
      %v86 = vsel %vm40, %v85, 0.0
      %87 = vadd.xlane.f32.xlu0 %v86
      %v88 = vpop.xlane.xlu0 %87
      %v89 = vmul.f32 %v88, %v82
      %v90 = vadd.f32 %v89, 1e-05
      %v91 = vrsqrt.pop %v90
      %v92 = vmul.f32 %v91, %v90
      %v93 = vmul.f32 %v92, %v91
      %v94 = vmul.f32 0.5, %v93
      %v95 = vsub.f32 1.5, %v94
      %v96 = vmul.f32 %v91, %v95
      %vm97 = vweird.f32 %v90
      %vm98 = vweird.f32 %v91
      %vm99 = vmor %vm97, %vm98
      %v100 = vsel %vm99, %v91, %v96
      %v101 = vmul.f32 %v84, %v100
      %v102 = vld [vmem:[%s3] sm:$0x1]
      %v104 = vperm.slane %v102, 0
      %v106 = vmul.f32 %v101, %v104
      %v107 = vld [vmem:[%s4] sm:$0x1]
      %v109 = vperm.slane %v107, 0
      %v111 = vadd.f32 %v106, %v109
      %112 = vst.msk [vmem:[#allocation2] sm:$0xff] %vm40, %v111
    $region33: #{irbert_lm_head.1} parent=1 // pred_fallthru
      _
    %v113 = vld [vmem:[#allocation2] sm:$0xff]
    %v114 = vld [vmem:[%s5] sm:$0xff]
    %v115 = vld [vmem:[%s5 + $0x8] sm:$0xff]
    %v116 = vld [vmem:[%s5 + $0x10] sm:$0xff]
    %v117 = vld [vmem:[%s5 + $0x18] sm:$0xff]
    %v118 = vld [vmem:[%s6] sm:$0x1]
    %v120 = vperm.slane %v118, 0
    %vm122 = vcmask 261120
    %v124 = vsel %vm122, %v113, 0
    %126 = vmatpush.msra.mxu0 0.0
    %127 = vmatpush.msra.mxu0 0.0
    %128 = vmatpush.msra.mxu0 0.0
    %129 = vmatpush.msra.mxu0 0.0
    %130 = vmatpush.msra.mxu0 0.0
    %131 = vmatpush.msra.mxu0 0.0
    %132 = vmatpush.msra.mxu0 0.0
    %133 = vmatpush.msra.mxu0 0.0
    %134 = vmatpush.msra.mxu0 0.0
    %135 = vmatpush.msra.mxu0 0.0
    %136 = vmatpush.msra.mxu0 0.0
    %137 = vmatpush.msra.mxu0 0.0
    %138 = vmatpush.msra.mxu0 %v117
    %139 = vmatpush.msra.mxu0 %v116
    %140 = vmatpush.msra.mxu0 %v115
    %141 = vmatpush.msra.mxu0 %v114
    %142 = vmatmul.f32.gmra.mxu0 %v124
    %v143 = vpop.f32.mrf.mxu0
    %v144 = vadd.f32 %v120, %v143
    %145 = vdwg.mxu0
    %146 = vst [vmem:[#allocation3] sm:$0xff] %v144
    // Predicated region
    $region34: #{irbert_lm_head.1} parent=1 // pred_check
      _
    $region35: #{irbert_lm_head.1} parent=1 // pred_check_branch
      %148 = sbr.rel (0) target = $region37
    $region36: #{irbert_lm_head.1} parent=1 // pred_region
      %150 = vsyncadd [#allocation4], 0
      %s152 = sshll.u32 [#allocation3], 4
      %s153 = int_to_ptr.vmem [resolvable:$true] %s152
      %s154 = sshll.u32 %s7, 4
      %s155 = int_to_ptr.hbm [resolvable:$true] %s154
      %157 = dma.vmem_to_hbm [thread:$0]  %s153, 128, %s155, [#allocation4]
    $region37: #{irbert_lm_head.1} parent=1 // pred_fallthru
      _
    // Predicated region
    $region38: #{irbert_lm_head.1} parent=1 // pred_check
      _
    $region39: #{irbert_lm_head.1} parent=1 // pred_check_branch
      %159 = sbr.rel (0) target = $region41
    $region40: #{irbert_lm_head.1} parent=1 // pred_region
      %161 = dma.done [#allocation4], 128
    $region41: #{irbert_lm_head.1} parent=1 // pred_fallthru
      _
    %162 = vsyncpa [#allocation4], 1

</llo_original>
